<compile_context>
chip_gen: v7x
topology: tpu7x:2x2x1
jax: 0.10.0
libtpu: 0.0.40
codegen_flags: <defaults>
</compile_context>

<pallas_src>
import math

import jax
import jax.numpy as jnp
import numpy as np
from jax.experimental import pallas as pl
from jax.experimental.pallas import tpu as pltpu

# ----------------------------- sizes --------------------------------------
B = 8        # batch rows per step
DX = 32      # observation dim
DZ = 16      # latent dim
S = 2        # independent sequences (parallel grid axis -> 2nd TensorCore on v7x)
T = 16       # autoregressive steps (state carried in VMEM scratch)

LANES = 128                    # lane-dense slab width for packed in/out
DIN_QP = DZ + 2 * DX           # 80: rows of packed prior/posterior weight block
DIN_C = DZ + DX                # 48: rows of packed cond-like weight block
HQP = 4 * DZ                   # 64: [mu_q | lv_q | mu_p | lv_p]
HC = 2 * DX                    # 64: [mu_x | lv_x]
assert DIN_QP + DIN_C == LANES
assert HQP == HC == 64

# output slab lane layout: [z(16) | mu_x(32) | lv_x(32) | cll(1) | kl(1) | pad]
O_Z = 0
O_MUX = DZ
O_LVX = DZ + DX
O_CLL = DZ + 2 * DX
O_KL = O_CLL + 1
O_PAD = LANES - (O_KL + 1)

_LOG2PI = math.log(2.0 * math.pi)


# ----------------------------- kernel --------------------------------------
def _model_seq_kernel(xs_ref, init_ref, w_ref, b_ref, out_ref, state_ref):
    # xs_ref   : (1, 1, B, 128)  [x(32) | eps(16) | pad]   streamed per (s, t)
    # init_ref : (1, B, 128)     [prev_x(32) | prev_z(16) | pad], resident per s
    # w_ref    : (128, 64) bf16  rows [prev_z|x|prev_x] -> q/p heads, rows [z|prev_x] -> x head
    # b_ref    : (2, 64)   f32   row 0 = [bq|bp], row 1 = bc
    # out_ref  : (1, 1, B, 128)  [z | mu_x | lv_x | cll | kl | pad]
    # state_ref: (B, 128) VMEM scratch, carries [prev_x | prev_z] across t
    t = pl.program_id(1)
    f32 = jnp.float32
    bf16 = jnp.bfloat16

    @pl.when(t == 0)
    def _():
        state_ref[...] = init_ref[0]          # reset(): prev_x / prev_z init state

    step = xs_ref[0, 0]                        # (B, 128)
    x_t = step[:, 0:DX]
    eps_t = step[:, DX:DX + DZ]

    st = state_ref[...]                        # (B, 128)
    prev_x = st[:, 0:DX]
    prev_z = st[:, DX:DX + DZ]

    # --- fused prior + approximate posterior (one block-structured MXU op) ---
    in1 = jnp.concatenate([prev_z, x_t, prev_x], axis=-1)            # (B, 80)
    h1 = jnp.dot(in1.astype(bf16), w_ref[pl.ds(0, DIN_QP), :],
                 preferred_element_type=f32) + b_ref[0:1, :]
    mu_q = h1[:, 0:DZ]
    lv_q = h1[:, DZ:2 * DZ]
    mu_p = h1[:, 2 * DZ:3 * DZ]
    lv_p = h1[:, 3 * DZ:4 * DZ]

    # --- reparameterized sample from approx posterior ---
    z = mu_q + jnp.exp(0.5 * lv_q) * eps_t                           # (B, DZ)

    # --- fused conditional likelihood p(x | z, prev_x) ---
    in2 = jnp.concatenate([z, prev_x], axis=-1)                      # (B, 48)
    h2 = jnp.dot(in2.astype(bf16), w_ref[pl.ds(DIN_QP, DIN_C), :],
                 preferred_element_type=f32) + b_ref[1:2, :]
    mu_x = h2[:, 0:DX]
    lv_x = h2[:, DX:2 * DX]

    # --- evaluate(): Gaussian log-likelihood of x_t, summed over DX ---
    ll = -0.5 * (f32(_LOG2PI) + lv_x + (x_t - mu_x) ** 2 * jnp.exp(-lv_x))
    cll = jnp.sum(ll, axis=-1, keepdims=True)                        # (B, 1)

    # --- evaluate(): analytic KL(q || p), summed over DZ ---
    kl_el = 0.5 * (lv_p - lv_q
                   + (jnp.exp(lv_q) + (mu_q - mu_p) ** 2) * jnp.exp(-lv_p)
                   - 1.0)
    kl = jnp.sum(kl_el, axis=-1, keepdims=True)                      # (B, 1)

    # --- single lane-dense output slab (one unmasked store / one DMA) ---
    bsz = x_t.shape[0]
    pad = jnp.zeros((bsz, O_PAD), f32)
    out_ref[0, 0] = jnp.concatenate([z, mu_x, lv_x, cll, kl, pad], axis=-1)

    # --- carry state forward: prev_x <- x_t, prev_z <- z (full-width store) ---
    state_pad = jnp.zeros((bsz, LANES - DX - DZ), f32)
    state_ref[...] = jnp.concatenate([x_t, z, state_pad], axis=-1)


# ----------------------------- wrapper --------------------------------------
def model_sequence(xs, eps, params, prev_x0=None, prev_z0=None):
    """Run T forward()+evaluate() steps for S independent sequences in one kernel.

    xs  : (S, T, B, DX)  observations
    eps : (S, T, B, DZ)  fresh reparameterization noise per step
    """
    s, t, b, dx = xs.shape
    dz = eps.shape[-1]
    assert (dx, dz) == (DX, DZ)

    # pack per-step streaming tensors into one lane-dense slab (1 input DMA / step)
    xs_eps = jnp.zeros((s, t, b, LANES), jnp.float32)
    xs_eps = xs_eps.at[..., 0:DX].set(xs)
    xs_eps = xs_eps.at[..., DX:DX + DZ].set(eps)

    # reset() state: prev_x = 0, prev_z = 0 unless explicitly provided
    init_state = jnp.zeros((s, b, LANES), jnp.float32)
    if prev_x0 is not None:
        init_state = init_state.at[:, :, 0:DX].set(prev_x0)
    if prev_z0 is not None:
        init_state = init_state.at[:, :, DX:DX + DZ].set(prev_z0)

    out = pl.pallas_call(
        _model_seq_kernel,
        out_shape=jax.ShapeDtypeStruct((s, t, b, LANES), jnp.float32),
        grid_spec=pltpu.PrefetchScalarGridSpec(
            num_scalar_prefetch=0,
            grid=(s, t),
            in_specs=[
                pl.BlockSpec((1, 1, b, LANES), lambda si, ti: (si, ti, 0, 0)),  # x|eps
                pl.BlockSpec((1, b, LANES), lambda si, ti: (si, 0, 0)),          # init state
                pl.BlockSpec((LANES, HQP), lambda si, ti: (0, 0)),               # W (resident)
                pl.BlockSpec((2, HQP), lambda si, ti: (0, 0)),                   # b (resident)
            ],
            out_specs=pl.BlockSpec((1, 1, b, LANES), lambda si, ti: (si, ti, 0, 0)),
            scratch_shapes=[pltpu.VMEM((b, LANES), jnp.float32)],
        ),
        compiler_params=pltpu.CompilerParams(
            dimension_semantics=("parallel", "arbitrary")),
    )(xs_eps, init_state, params["w_all"], params["b_all"])

    return {
        "z": out[..., O_Z:O_Z + DZ],
        "mu_x": out[..., O_MUX:O_MUX + DX],
        "logvar_x": out[..., O_LVX:O_LVX + DX],
        "cll": out[..., O_CLL],
        "kl": out[..., O_KL],
    }


# ----------------------------- params --------------------------------------
def init_params(key):
    ks = jax.random.split(key, 4)
    scale = 0.1
    wq = scale * jax.random.normal(ks[0], (DZ + DX, 2 * DZ), jnp.float32)   # rows [prev_z; x]
    wp = scale * jax.random.normal(ks[1], (DZ + DX, 2 * DZ), jnp.float32)   # rows [prev_z; prev_x]
    wcz = scale * jax.random.normal(ks[2], (DZ, 2 * DX), jnp.float32)
    wcx = scale * jax.random.normal(ks[3], (DX, 2 * DX), jnp.float32)
    bq = jnp.zeros((2 * DZ,), jnp.float32)
    bp = jnp.zeros((2 * DZ,), jnp.float32)
    bc = jnp.zeros((2 * DX,), jnp.float32)

    # block-structured packed q/p weight: input rows = [prev_z(16) | x(32) | prev_x(32)]
    # cols 0:32 -> approx-post head, cols 32:64 -> prior head
    w_qp = jnp.zeros((DIN_QP, HQP), jnp.float32)
    w_qp = w_qp.at[0:DZ, 0:2 * DZ].set(wq[0:DZ])          # prev_z -> q
    w_qp = w_qp.at[DZ:DZ + DX, 0:2 * DZ].set(wq[DZ:])     # x      -> q
    w_qp = w_qp.at[0:DZ, 2 * DZ:].set(wp[0:DZ])           # prev_z -> p
    w_qp = w_qp.at[DZ + DX:, 2 * DZ:].set(wp[DZ:])        # prev_x -> p
    # packed cond-like weight: input rows = [z(16) | prev_x(32)]
    w_c = jnp.concatenate([wcz, wcx], axis=0)             # (48, 64)

    w_all = jnp.concatenate([w_qp, w_c], axis=0).astype(jnp.bfloat16)   # (128, 64)
    b_all = jnp.stack([jnp.concatenate([bq, bp]), bc], axis=0)          # (2, 64) f32
    return {"w_all": w_all, "b_all": b_all}


# ----------------------------- pure-JAX reference ---------------------------
def model_sequence_ref(xs, eps, params):
    w = params["w_all"]
    b = params["b_all"]
    w1, w2 = w[0:DIN_QP], w[DIN_QP:]
    b1, b2 = b[0:1], b[1:2]
    s, t, bsz, _ = xs.shape
    prev_x = jnp.zeros((s, bsz, DX), jnp.float32)
    prev_z = jnp.zeros((s, bsz, DZ), jnp.float32)
    outs = {"z": [], "mu_x": [], "logvar_x": [], "cll": [], "kl": []}
    for ti in range(t):
        x_t, e_t = xs[:, ti], eps[:, ti]
        in1 = jnp.concatenate([prev_z, x_t, prev_x], axis=-1).astype(jnp.bfloat16)
        h1 = jnp.dot(in1, w1, preferred_element_type=jnp.float32) + b1
        mu_q, lv_q = h1[..., :DZ], h1[..., DZ:2 * DZ]
        mu_p, lv_p = h1[..., 2 * DZ:3 * DZ], h1[..., 3 * DZ:]
        z = mu_q + jnp.exp(0.5 * lv_q) * e_t
        in2 = jnp.concatenate([z, prev_x], axis=-1).astype(jnp.bfloat16)
        h2 = jnp.dot(in2, w2, preferred_element_type=jnp.float32) + b2
        mu_x, lv_x = h2[..., :DX], h2[..., DX:]
        ll = -0.5 * (_LOG2PI + lv_x + (x_t - mu_x) ** 2 * jnp.exp(-lv_x))
        kl_el = 0.5 * (lv_p - lv_q
                       + (jnp.exp(lv_q) + (mu_q - mu_p) ** 2) * jnp.exp(-lv_p) - 1.0)
        outs["z"].append(z)
        outs["mu_x"].append(mu_x)
        outs["logvar_x"].append(lv_x)
        outs["cll"].append(ll.sum(-1))
        outs["kl"].append(kl_el.sum(-1))
        prev_x, prev_z = x_t, z
    return {k: jnp.stack(v, axis=1) for k, v in outs.items()}


# ----------------------------- main -----------------------------------------
if __name__ == "__main__":
    key = jax.random.PRNGKey(0)
    kp, kx, keps = jax.random.split(key, 3)

    params = init_params(kp)
    xs = jax.random.normal(kx, (S, T, B, DX), jnp.float32)     # observation sequence
    eps = jax.random.normal(keps, (S, T, B, DZ), jnp.float32)  # fresh noise per step

    out = jax.jit(model_sequence)(xs, eps, params)
    jax.block_until_ready(out)

    assert out["z"].shape == (S, T, B, DZ)
    assert out["mu_x"].shape == (S, T, B, DX)
    assert out["logvar_x"].shape == (S, T, B, DX)
    assert out["cll"].shape == (S, T, B)
    assert out["kl"].shape == (S, T, B)

    ref = model_sequence_ref(xs, eps, params)
    for k in ("z", "mu_x", "logvar_x", "cll", "kl"):
        np.testing.assert_allclose(np.asarray(out[k]), np.asarray(ref[k]),
                                   rtol=5e-3, atol=5e-3)

    print("KERNEL_OK")
</pallas_src>

<mosaic_0001>
module attributes {stable_mosaic.version = 11 : i64} {
  func.func @_model_seq_kernel(%arg0: i32, %arg1: i32, %arg2: memref<1x1x8x128xf32, #tpu.memory_space<vmem>>, %arg3: memref<1x8x128xf32, #tpu.memory_space<vmem>>, %arg4: memref<128x64xbf16, #tpu.memory_space<vmem>>, %arg5: memref<2x64xf32, #tpu.memory_space<vmem>>, %arg6: memref<1x1x8x128xf32, #tpu.memory_space<vmem>>, %arg7: memref<8x128xf32, #tpu.memory_space<vmem>>) attributes {dimension_semantics = [#tpu.dimension_semantics<parallel>, #tpu.dimension_semantics<arbitrary>], iteration_bounds = array<i64: 2, 16>, scalar_prefetch = 0 : i64, scratch_operands = 1 : i64, tpu.core_type = #tpu.core_type<tc>, window_params = [{transform_indices = @transform_0, window_bounds = array<i64: 1, 1, 8, 128>}, {transform_indices = @transform_1, window_bounds = array<i64: 1, 8, 128>}, {pipeline_mode = #tpu.pipeline_mode<synchronous>, transform_indices = @transform_2, window_bounds = array<i64: 128, 64>}, {pipeline_mode = #tpu.pipeline_mode<synchronous>, transform_indices = @transform_3, window_bounds = array<i64: 2, 64>}, {transform_indices = @transform_4, window_bounds = array<i64: 1, 1, 8, 128>}]} {
    %c0_i32 = arith.constant 0 : i32
    %0 = arith.cmpi eq, %arg1, %c0_i32 : i32
    %1 = arith.extui %0 : i1 to i32
    %c0_i32_0 = arith.constant 0 : i32
    %2 = arith.cmpi ne, %1, %c0_i32_0 : i32
    scf.if %2 {
      %c0_30 = arith.constant 0 : index
      %c0_31 = arith.constant 0 : index
      %c0_32 = arith.constant 0 : index
      %72 = vector.load %arg3[%c0_30, %c0_31, %c0_32] : memref<1x8x128xf32, #tpu.memory_space<vmem>>, vector<1x8x128xf32>
      %73 = vector.shape_cast %72 : vector<1x8x128xf32> to vector<8x128xf32>
      %c0_33 = arith.constant 0 : index
      %c0_34 = arith.constant 0 : index
      %74 = vector.load %arg7[%c0_33, %c0_34] : memref<8x128xf32, #tpu.memory_space<vmem>>, vector<8x128xf32>
      tpu.vector_store %arg7[%c0_33, %c0_34], %73 {strides = array<i32>} : memref<8x128xf32, #tpu.memory_space<vmem>>, vector<8x128xf32>,
    } else {
    }
    %c0 = arith.constant 0 : index
    %c0_1 = arith.constant 0 : index
    %c0_2 = arith.constant 0 : index
    %c0_3 = arith.constant 0 : index
    %3 = vector.load %arg2[%c0, %c0_1, %c0_2, %c0_3] : memref<1x1x8x128xf32, #tpu.memory_space<vmem>>, vector<1x1x8x128xf32>
    %4 = vector.shape_cast %3 : vector<1x1x8x128xf32> to vector<8x128xf32>
    %5 = vector.extract_strided_slice %4 {offsets = [0, 0], sizes = [8, 32], strides = [1, 1]} : vector<8x128xf32> to vector<8x32xf32>
    %6 = vector.extract_strided_slice %4 {offsets = [0, 32], sizes = [8, 16], strides = [1, 1]} : vector<8x128xf32> to vector<8x16xf32>
    %c0_4 = arith.constant 0 : index
    %c0_5 = arith.constant 0 : index
    %7 = vector.load %arg7[%c0_4, %c0_5] : memref<8x128xf32, #tpu.memory_space<vmem>>, vector<8x128xf32>
    %8 = vector.extract_strided_slice %7 {offsets = [0, 0], sizes = [8, 32], strides = [1, 1]} : vector<8x128xf32> to vector<8x32xf32>
    %9 = vector.extract_strided_slice %7 {offsets = [0, 32], sizes = [8, 16], strides = [1, 1]} : vector<8x128xf32> to vector<8x16xf32>
    %10 = tpu.concatenate %9, %5, %8 in 1 : vector<8x16xf32>, vector<8x32xf32>, vector<8x32xf32> -> vector<8x80xf32>
    %11 = arith.truncf %10 : vector<8x80xf32> to vector<8x80xbf16>
    %c0_6 = arith.constant 0 : index
    %c0_7 = arith.constant 0 : index
    %12 = vector.load %arg4[%c0_6, %c0_7] : memref<128x64xbf16, #tpu.memory_space<vmem>>, vector<80x64xbf16>
    %cst = arith.constant dense<0.000000e+00> : vector<8x64xf32>
    %13 = tpu.matmul %11, %12, %cst {dimension_numbers = #tpu.dot_dimension_numbers<[1], [0], [0], [1], [0, 0, 1, 1], [], []>} : vector<8x80xbf16>, vector<80x64xbf16>, vector<8x64xf32> -> vector<8x64xf32>
    %c0_8 = arith.constant 0 : index
    %c0_9 = arith.constant 0 : index
    %14 = vector.load %arg5[%c0_8, %c0_9] : memref<2x64xf32, #tpu.memory_space<vmem>>, vector<1x64xf32>
    %15 = vector.broadcast %14 : vector<1x64xf32> to vector<8x64xf32>
    %16 = arith.addf %13, %15 : vector<8x64xf32>
    %17 = vector.extract_strided_slice %16 {offsets = [0, 0], sizes = [8, 16], strides = [1, 1]} : vector<8x64xf32> to vector<8x16xf32>
    %18 = vector.extract_strided_slice %16 {offsets = [0, 16], sizes = [8, 16], strides = [1, 1]} : vector<8x64xf32> to vector<8x16xf32>
    %19 = vector.extract_strided_slice %16 {offsets = [0, 32], sizes = [8, 16], strides = [1, 1]} : vector<8x64xf32> to vector<8x16xf32>
    %20 = vector.extract_strided_slice %16 {offsets = [0, 48], sizes = [8, 16], strides = [1, 1]} : vector<8x64xf32> to vector<8x16xf32>
    %cst_10 = arith.constant 5.000000e-01 : f32
    %21 = vector.broadcast %cst_10 : f32 to vector<8x16xf32>
    %22 = arith.mulf %21, %18 : vector<8x16xf32>
    %23 = math.exp %22 : vector<8x16xf32>
    %24 = arith.mulf %23, %6 : vector<8x16xf32>
    %25 = arith.addf %17, %24 : vector<8x16xf32>
    %26 = tpu.concatenate %25, %8 in 1 : vector<8x16xf32>, vector<8x32xf32> -> vector<8x48xf32>
    %27 = arith.truncf %26 : vector<8x48xf32> to vector<8x48xbf16>
    %c80 = arith.constant 80 : index
    %c0_11 = arith.constant 0 : index
    %28 = vector.load %arg4[%c80, %c0_11] : memref<128x64xbf16, #tpu.memory_space<vmem>>, vector<48x64xbf16>
    %cst_12 = arith.constant dense<0.000000e+00> : vector<8x64xf32>
    %29 = tpu.matmul %27, %28, %cst_12 {dimension_numbers = #tpu.dot_dimension_numbers<[1], [0], [0], [1], [0, 0, 1, 1], [], []>} : vector<8x48xbf16>, vector<48x64xbf16>, vector<8x64xf32> -> vector<8x64xf32>
    %c1 = arith.constant 1 : index
    %c0_13 = arith.constant 0 : index
    %30 = vector.load %arg5[%c1, %c0_13] : memref<2x64xf32, #tpu.memory_space<vmem>>, vector<1x64xf32>
    %31 = vector.broadcast %30 : vector<1x64xf32> to vector<8x64xf32>
    %32 = arith.addf %29, %31 : vector<8x64xf32>
    %33 = vector.extract_strided_slice %32 {offsets = [0, 0], sizes = [8, 32], strides = [1, 1]} : vector<8x64xf32> to vector<8x32xf32>
    %34 = vector.extract_strided_slice %32 {offsets = [0, 32], sizes = [8, 32], strides = [1, 1]} : vector<8x64xf32> to vector<8x32xf32>
    %cst_14 = arith.constant 1.83787704 : f32
    %35 = vector.broadcast %cst_14 : f32 to vector<8x32xf32>
    %36 = arith.addf %35, %34 : vector<8x32xf32>
    %37 = arith.subf %5, %33 : vector<8x32xf32>
    %38 = arith.mulf %37, %37 : vector<8x32xf32>
    %cst_15 = arith.constant 0.000000e+00 : f32
    %39 = vector.broadcast %cst_15 : f32 to vector<8x32xf32>
    %40 = arith.subf %39, %34 : vector<8x32xf32>
    %41 = math.exp %40 : vector<8x32xf32>
    %42 = arith.mulf %38, %41 : vector<8x32xf32>
    %43 = arith.addf %36, %42 : vector<8x32xf32>
    %cst_16 = arith.constant -5.000000e-01 : f32
    %44 = vector.broadcast %cst_16 : f32 to vector<8x32xf32>
    %45 = arith.mulf %44, %43 : vector<8x32xf32>
    %cst_17 = arith.constant dense<0.000000e+00> : vector<8xf32>
    %46 = vector.multi_reduction <add>, %45, %cst_17 [1] : vector<8x32xf32> to vector<8xf32>
    %47 = vector.shape_cast %46 : vector<8xf32> to vector<8x1xf32>
    %48 = arith.subf %20, %18 : vector<8x16xf32>
    %49 = math.exp %18 : vector<8x16xf32>
    %50 = arith.subf %17, %19 : vector<8x16xf32>
    %51 = arith.mulf %50, %50 : vector<8x16xf32>
    %52 = arith.addf %49, %51 : vector<8x16xf32>
    %cst_18 = arith.constant 0.000000e+00 : f32
    %53 = vector.broadcast %cst_18 : f32 to vector<8x16xf32>
    %54 = arith.subf %53, %20 : vector<8x16xf32>
    %55 = math.exp %54 : vector<8x16xf32>
    %56 = arith.mulf %52, %55 : vector<8x16xf32>
    %57 = arith.addf %48, %56 : vector<8x16xf32>
    %cst_19 = arith.constant 1.000000e+00 : f32
    %58 = vector.broadcast %cst_19 : f32 to vector<8x16xf32>
    %59 = arith.subf %57, %58 : vector<8x16xf32>
    %cst_20 = arith.constant 5.000000e-01 : f32
    %60 = vector.broadcast %cst_20 : f32 to vector<8x16xf32>
    %61 = arith.mulf %60, %59 : vector<8x16xf32>
    %cst_21 = arith.constant dense<0.000000e+00> : vector<8xf32>
    %62 = vector.multi_reduction <add>, %61, %cst_21 [1] : vector<8x16xf32> to vector<8xf32>
    %63 = vector.shape_cast %62 : vector<8xf32> to vector<8x1xf32>
    %cst_22 = arith.constant 0.000000e+00 : f32
    %64 = vector.broadcast %cst_22 : f32 to vector<8x46xf32>
    %65 = tpu.concatenate %25, %33, %34, %47, %63, %64 in 1 : vector<8x16xf32>, vector<8x32xf32>, vector<8x32xf32>, vector<8x1xf32>, vector<8x1xf32>, vector<8x46xf32> -> vector<8x128xf32>
    %c0_23 = arith.constant 0 : index
    %c0_24 = arith.constant 0 : index
    %c0_25 = arith.constant 0 : index
    %c0_26 = arith.constant 0 : index
    %66 = vector.load %arg6[%c0_23, %c0_24, %c0_25, %c0_26] : memref<1x1x8x128xf32, #tpu.memory_space<vmem>>, vector<1x1x8x128xf32>
    %67 = vector.shape_cast %66 : vector<1x1x8x128xf32> to vector<8x128xf32>
    %68 = vector.shape_cast %65 : vector<8x128xf32> to vector<1x1x8x128xf32>
    tpu.vector_store %arg6[%c0_23, %c0_24, %c0_25, %c0_26], %68 {strides = array<i32>} : memref<1x1x8x128xf32, #tpu.memory_space<vmem>>, vector<1x1x8x128xf32>,
    %cst_27 = arith.constant 0.000000e+00 : f32
    %69 = vector.broadcast %cst_27 : f32 to vector<8x80xf32>
    %70 = tpu.concatenate %5, %25, %69 in 1 : vector<8x32xf32>, vector<8x16xf32>, vector<8x80xf32> -> vector<8x128xf32>
    %c0_28 = arith.constant 0 : index
    %c0_29 = arith.constant 0 : index
    %71 = vector.load %arg7[%c0_28, %c0_29] : memref<8x128xf32, #tpu.memory_space<vmem>>, vector<8x128xf32>
    tpu.vector_store %arg7[%c0_28, %c0_29], %70 {strides = array<i32>} : memref<8x128xf32, #tpu.memory_space<vmem>>, vector<8x128xf32>,
    return
  }
  func.func @transform_0(%arg0: i32, %arg1: i32) -> (i32, i32, i32, i32) {
    %c0_i32 = arith.constant 0 : i32
    %c0_i32_0 = arith.constant 0 : i32
    %c0_i32_1 = arith.constant 0 : i32
    return %arg0, %arg1, %c0_i32, %c0_i32_0 : i32, i32, i32, i32
  }
  func.func @transform_1(%arg0: i32, %arg1: i32) -> (i32, i32, i32) {
    %c0_i32 = arith.constant 0 : i32
    %c0_i32_0 = arith.constant 0 : i32
    %c0_i32_1 = arith.constant 0 : i32
    return %arg0, %c0_i32, %c0_i32_0 : i32, i32, i32
  }
  func.func @transform_2(%arg0: i32, %arg1: i32) -> (i32, i32) {
    %c0_i32 = arith.constant 0 : i32
    %c0_i32_0 = arith.constant 0 : i32
    %c0_i32_1 = arith.constant 0 : i32
    return %c0_i32, %c0_i32_0 : i32, i32
  }
  func.func @transform_3(%arg0: i32, %arg1: i32) -> (i32, i32) {
    %c0_i32 = arith.constant 0 : i32
    %c0_i32_0 = arith.constant 0 : i32
    %c0_i32_1 = arith.constant 0 : i32
    return %c0_i32, %c0_i32_0 : i32, i32
  }
  func.func @transform_4(%arg0: i32, %arg1: i32) -> (i32, i32, i32, i32) {
    %c0_i32 = arith.constant 0 : i32
    %c0_i32_0 = arith.constant 0 : i32
    %c0_i32_1 = arith.constant 0 : i32
    return %arg0, %arg1, %c0_i32, %c0_i32_0 : i32, i32, i32, i32
  }
}

</mosaic_0001>

<llo_original>
// kernel: model_sequence.1
$region0: #{model_sequence.1}
  #allocation0 [shape = 'u32[]', space=smem, size = 0x4, offset = 0x4, fixed_abs, tag = 'smem constant byte address 0x4 - core index']
  #allocation1 [shape = 'u32[144,128]{1,0:T(1,128)}', space=vmem, size = 0x12000, scoped, tag = 'internal scratch']
  #allocation2 [shape = 'f32[8,128]{1,0:T(8,128)}', space=vmem, size = 0x1000, scoped, tag = 'scratch operand']
  %s0 = inlined_call_operand.vmem [shape: f32[2,16,8,128], index: 0, kind: input, shape index: {}]
  %s1 = inlined_call_operand.vmem [shape: f32[2,8,128], index: 1, kind: input, shape index: {}]
  %s2 = inlined_call_operand.vmem [shape: bf16[128,64], index: 2, kind: input, shape index: {}]
  %s3 = inlined_call_operand.vmem [shape: f32[2,64], index: 3, kind: input, shape index: {}]
  %s4 = inlined_call_operand.vmem [shape: f32[2,16,8,128], index: 4, kind: output, shape index: {}]
  %s5 = sld [smem:[#allocation0]]
  $region53: #{model_sequence.1} parent=0
    _
  %s7 = ssub.s32 1, %s5
  %s8 = scalar_select 0, %s7, %s5
  loop: start=0, step=1, limit=34
  $region2: #{model_sequence.1} parent=0 // loop_pre_header
    _
  $region3: #{model_sequence.1} parent=0 // loop_header
    %s10 = sphi 0, %s14
    %p11 = scmp.ge.s32.totalorder %s10, 34
    %s17 = sphi 0, %s29
    %s18 = sphi 0, %s25
    %s19 = sphi 0, %s17
    %s20 = sphi 0, %s18
    %s21 = sphi 0, %s19
    %s22 = sphi 0, %s20
    %s34 = sphi 0, %s36
    %s37 = sphi 0, %s34
    %s38 = sphi 0, %s37
    %s54 = sphi 0, %s38
    %s60 = sphi 0, %s62
    %s63 = sphi 0, %s60
    %s64 = sphi 0, %s63
    %s80 = sphi 0, %s64
    %s84 = sphi 0, %s84
    %s86 = sphi 0, %s84
    %s87 = sphi 0, %s86
    %s101 = sphi 0, %s87
    %s105 = sphi 0, %s105
    %s107 = sphi 0, %s105
    %s108 = sphi 0, %s107
    %s122 = sphi 0, %s108
    %s130 = sphi 0, %s132
    %s133 = sphi 0, %s130
    %s134 = sphi 0, %s133
    %s150 = sphi 0, %s134
  $region4: #{model_sequence.1} parent=0 // loop_header_branch
    %13 = sbr.rel (%p11) target = $region8
  $region5: #{model_sequence.1} parent=0 // loop_body
    %s15 = ssub.s32 %s10, 1
    %s16 = ssub.s32 %s10, 2
    %s23 = sadd.s32 1, %s18
    %p24 = scmp.ge.s32.totalorder %s23, 16
    %s25 = scalar_select %p24, 0, %s23
    %s26 = sadd.s32 1, %s17
    %s27 = scalar_select %p24, %s26, %s17
    %p28 = scmp.ge.s32.totalorder %s27, 2
    %s29 = scalar_select %p28, 0, %s27
    %s30 = ssub.s32 %s17, %s29
    %s31 = ssub.s32 %s18, %s25
    %s32 = sor.u32 %s30, %s31
    %p33 = scmp.eq.s32.totalorder %s32, 0
    %s35 = sadd.s32 %s34, 1
    %s36 = scalar_select %p33, %s34, %s35
    %p39 = pneg %p33
    %p40 = scmp.eq.s32.totalorder %s10, 31
    %p41 = por %p39, %p40
    %p42 = scmp.ne.s32.totalorder %s34, %s37
    %p43 = scmp.eq.s32.totalorder %s10, 0
    %p44 = por %p42, %p43
    %p45 = scmp.ne.s32.totalorder %s34, %s37
    %p46 = scmp.eq.s32.totalorder %s15, 31
    %p47 = por %p45, %p46
    %p48 = scmp.ne.s32.totalorder %s37, %s38
    %p49 = scmp.eq.s32.totalorder %s15, 0
    %p50 = por %p48, %p49
    %p51 = scmp.ne.s32.totalorder %s37, %s38
    %p52 = scmp.eq.s32.totalorder %s16, 31
    %p53 = por %p51, %p52
    %p55 = scmp.ne.s32.totalorder %s38, %s54
    %p56 = scmp.eq.s32.totalorder %s16, 0
    %p57 = por %p55, %p56
    %s58 = ssub.s32 %s17, %s29
    %p59 = scmp.eq.s32.totalorder %s58, 0
    %s61 = sadd.s32 %s60, 1
    %s62 = scalar_select %p59, %s60, %s61
    %p65 = pneg %p59
    %p66 = scmp.eq.s32.totalorder %s10, 31
    %p67 = por %p65, %p66
    %p68 = scmp.ne.s32.totalorder %s60, %s63
    %p69 = scmp.eq.s32.totalorder %s10, 0
    %p70 = por %p68, %p69
    %p71 = scmp.ne.s32.totalorder %s60, %s63
    %p72 = scmp.eq.s32.totalorder %s15, 31
    %p73 = por %p71, %p72
    %p74 = scmp.ne.s32.totalorder %s63, %s64
    %p75 = scmp.eq.s32.totalorder %s15, 0
    %p76 = por %p74, %p75
    %p77 = scmp.ne.s32.totalorder %s63, %s64
    %p78 = scmp.eq.s32.totalorder %s16, 31
    %p79 = por %p77, %p78
    %p81 = scmp.ne.s32.totalorder %s64, %s80
    %p82 = scmp.eq.s32.totalorder %s16, 0
    %p83 = por %p81, %p82
    %s85 = sadd.s32 %s84, 1
    %p88 = scmp.eq.s32.totalorder %s10, 31
    %p89 = scmp.ne.s32.totalorder %s84, %s86
    %p90 = scmp.eq.s32.totalorder %s10, 0
    %p91 = por %p89, %p90
    %p92 = scmp.ne.s32.totalorder %s84, %s86
    %p93 = scmp.eq.s32.totalorder %s15, 31
    %p94 = por %p92, %p93
    %p95 = scmp.ne.s32.totalorder %s86, %s87
    %p96 = scmp.eq.s32.totalorder %s15, 0
    %p97 = por %p95, %p96
    %p98 = scmp.ne.s32.totalorder %s86, %s87
    %p99 = scmp.eq.s32.totalorder %s16, 31
    %p100 = por %p98, %p99
    %p102 = scmp.ne.s32.totalorder %s87, %s101
    %p103 = scmp.eq.s32.totalorder %s16, 0
    %p104 = por %p102, %p103
    %s106 = sadd.s32 %s105, 1
    %p109 = scmp.eq.s32.totalorder %s10, 31
    %p110 = scmp.ne.s32.totalorder %s105, %s107
    %p111 = scmp.eq.s32.totalorder %s10, 0
    %p112 = por %p110, %p111
    %p113 = scmp.ne.s32.totalorder %s105, %s107
    %p114 = scmp.eq.s32.totalorder %s15, 31
    %p115 = por %p113, %p114
    %p116 = scmp.ne.s32.totalorder %s107, %s108
    %p117 = scmp.eq.s32.totalorder %s15, 0
    %p118 = por %p116, %p117
    %p119 = scmp.ne.s32.totalorder %s107, %s108
    %p120 = scmp.eq.s32.totalorder %s16, 31
    %p121 = por %p119, %p120
    %p123 = scmp.ne.s32.totalorder %s108, %s122
    %p124 = scmp.eq.s32.totalorder %s16, 0
    %p125 = por %p123, %p124
    %s126 = ssub.s32 %s17, %s29
    %s127 = ssub.s32 %s18, %s25
    %s128 = sor.u32 %s126, %s127
    %p129 = scmp.eq.s32.totalorder %s128, 0
    %s131 = sadd.s32 %s130, 1
    %s132 = scalar_select %p129, %s130, %s131
    %p135 = pneg %p129
    %p136 = scmp.eq.s32.totalorder %s10, 31
    %p137 = por %p135, %p136
    %p138 = scmp.ne.s32.totalorder %s130, %s133
    %p139 = scmp.eq.s32.totalorder %s10, 0
    %p140 = por %p138, %p139
    %p141 = scmp.ne.s32.totalorder %s130, %s133
    %p142 = scmp.eq.s32.totalorder %s15, 31
    %p143 = por %p141, %p142
    %p144 = scmp.ne.s32.totalorder %s133, %s134
    %p145 = scmp.eq.s32.totalorder %s15, 0
    %p146 = por %p144, %p145
    %p147 = scmp.ne.s32.totalorder %s133, %s134
    %p148 = scmp.eq.s32.totalorder %s16, 31
    %p149 = por %p147, %p148
    %p151 = scmp.ne.s32.totalorder %s134, %s150
    %p152 = scmp.eq.s32.totalorder %s16, 0
    %p153 = por %p151, %p152
    %p154 = scmp.le.s32.totalorder 1, %s10
    %p155 = scmp.lt.s32.totalorder %s10, 33
    %p156 = pnand %p154, %p155
    %p157 = pneg %p156
    // Predicated region
    $region9: #{model_sequence.1} parent=5 // pred_check
      _
    $region10: #{model_sequence.1} parent=5 // pred_check_branch
      %159 = sbr.rel (%p156) target = $region12
    $region11: #{model_sequence.1} parent=5 // pred_region
      %s160 = ssub.s32 %s10, 1
      // Predicated region
      $region13: #{model_sequence.1} parent=11 // pred_check
        %p161 = pneg %p97
      $region14: #{model_sequence.1} parent=11 // pred_check_branch
        %163 = sbr.rel (%p161) target = $region16
      $region15: #{model_sequence.1} parent=11 // pred_region
        _
      $region16: #{model_sequence.1} parent=11 // pred_fallthru
        _
      // Predicated region
      $region17: #{model_sequence.1} parent=11 // pred_check
        %p164 = pneg %p118
      $region18: #{model_sequence.1} parent=11 // pred_check_branch
        %166 = sbr.rel (%p164) target = $region20
      $region19: #{model_sequence.1} parent=11 // pred_region
        _
      $region20: #{model_sequence.1} parent=11 // pred_fallthru
        _
    $region12: #{model_sequence.1} parent=5 // pred_fallthru
      _
    %p167 = scmp.lt.s32.totalorder %s10, 32
    // Predicated region
    $region21: #{model_sequence.1} parent=5 // pred_check
      %p168 = pneg %p167
    $region22: #{model_sequence.1} parent=5 // pred_check_branch
      %170 = sbr.rel (%p168) target = $region24
    $region23: #{model_sequence.1} parent=5 // pred_region
      // Predicated region
      $region25: #{model_sequence.1} parent=23 // pred_check
        %p171 = pneg %p44
      $region26: #{model_sequence.1} parent=23 // pred_check_branch
        %173 = sbr.rel (%p171) target = $region28
      $region27: #{model_sequence.1} parent=23 // pred_region
        %p174 = scmp.lt.s32.totalorder %s17, 1
        %s175 = scalar_select %p174, %s17, 1
        %p176 = scmp.lt.s32.totalorder %s18, 15
        %s177 = scalar_select %p176, %s18, 15
        %s178 = smul.addr %s175, 16
        %s179 = sadd.s32 %s177, %s178
        %s180 = smul.addr %s179, 8
        %s181 = scalar_lea.vmem %s0, %s180
      $region28: #{model_sequence.1} parent=23 // pred_fallthru
        _
      // Predicated region
      $region29: #{model_sequence.1} parent=23 // pred_check
        %p182 = pneg %p70
      $region30: #{model_sequence.1} parent=23 // pred_check_branch
        %184 = sbr.rel (%p182) target = $region32
      $region31: #{model_sequence.1} parent=23 // pred_region
        %p185 = scmp.lt.s32.totalorder %s17, 1
        %s186 = scalar_select %p185, %s17, 1
        %s187 = smul.addr %s186, 8
        %s188 = scalar_lea.vmem %s1, %s187
      $region32: #{model_sequence.1} parent=23 // pred_fallthru
        _
    $region24: #{model_sequence.1} parent=5 // pred_fallthru
      _
    %p189 = scmp.le.s32.totalorder 1, %s10
    %p190 = scmp.lt.s32.totalorder %s10, 33
    %p191 = pnand %p189, %p190
    %p192 = pneg %p191
    // Predicated region
    $region33: #{model_sequence.1} parent=5 // pred_check
      _
    $region34: #{model_sequence.1} parent=5 // pred_check_branch
      %194 = sbr.rel (%p191) target = $region36
    $region35: #{model_sequence.1} parent=5 // pred_region
      %s195 = ssub.s32 %s10, 1
      %p196 = scmp.lt.s32.totalorder %s19, 1
      %s197 = scalar_select %p196, %s19, 1
      %p198 = scmp.lt.s32.totalorder %s20, 15
      %s199 = scalar_select %p198, %s20, 15
      %s200 = smul.addr %s197, 16
      %s201 = sadd.s32 %s199, %s200
      %s202 = smul.addr %s201, 8
      %s203 = scalar_lea.vmem %s0, %s202
      %p204 = pneg %p50
      %p205 = pneg %p47
      %p206 = scmp.lt.s32.totalorder %s19, 1
      %s207 = scalar_select %p206, %s19, 1
      %s208 = smul.addr %s207, 8
      %s209 = scalar_lea.vmem %s1, %s208
      %p210 = pneg %p76
      %p211 = pneg %p73
      %p212 = pneg %p97
      %p213 = pneg %p94
      %p214 = pneg %p118
      %p215 = pneg %p115
      %p216 = pneg %p146
      %p217 = pneg %p143
      %p218 = scmp.lt.s32.totalorder %s19, 1
      %s219 = scalar_select %p218, %s19, 1
      %p220 = scmp.lt.s32.totalorder %s20, 15
      %s221 = scalar_select %p220, %s20, 15
      %s222 = smul.addr %s219, 16
      %s223 = sadd.s32 %s221, %s222
      %s224 = smul.addr %s223, 8
      %s225 = scalar_lea.vmem %s4, %s224
      %p226 = scmp.lt.s32.totalorder %s19, 1
      %s227 = scalar_select %p226, %s19, 1
      %p228 = scmp.lt.s32.totalorder %s20, 15
      %s229 = scalar_select %p228, %s20, 15
      %s230 = smul.addr %s227, 16
      %s231 = sadd.s32 %s229, %s230
      %s232 = smul.addr %s231, 8
      %s233 = scalar_lea.vmem %s0, %s232
      %p234 = scmp.lt.s32.totalorder %s19, 1
      %s235 = scalar_select %p234, %s19, 1
      %s236 = smul.addr %s235, 8
      %s237 = scalar_lea.vmem %s1, %s236
      %p238 = scmp.lt.s32.totalorder %s19, 1
      %s239 = scalar_select %p238, %s19, 1
      %p240 = scmp.lt.s32.totalorder %s20, 15
      %s241 = scalar_select %p240, %s20, 15
      %s242 = smul.addr %s239, 16
      %s243 = sadd.s32 %s241, %s242
      %s244 = smul.addr %s243, 8
      %s245 = scalar_lea.vmem %s4, %s244
      %p247 = scmp.eq.s32.totalorder %s20, 0
      // Predicated region
      $region37: #{model_sequence.1} parent=35 // pred_check
        %p248 = pneg %p247
      $region38: #{model_sequence.1} parent=35 // pred_check_branch
        %250 = sbr.rel (%p248) target = $region40
      $region39: #{model_sequence.1} parent=35 // pred_region
        %v251 = vld [vmem:[%s237] sm:$0xff]
        %252 = vst [vmem:[#allocation2] sm:$0xff] %v251
      $region40: #{model_sequence.1} parent=35 // pred_fallthru
        _
      %v253 = vld [vmem:[%s233] sm:$0xff]
      %v254 = vld [vmem:[#allocation2] sm:$0xff]
      %256 = vrot.lane.b32.xlu0 %v254, 96
      %v257 = vpop.permute.xlu0 %256
      %260 = vrot.lane.b32.xlu0 %v253, 16
      %v261 = vpop.permute.xlu0 %260
      %263 = vrot.lane.b32.xlu0 %v254, 48
      %v264 = vpop.permute.xlu0 %263
      %vm266 = vcmask 130048
      %v267 = vsel %vm266, %v257, %v261
      %vm268 = vcmask 392192
      %v269 = vsel %vm268, %v267, %v264
      %v270 = vpack.c.bf16 %v269, %v269
      %v271 = vld [vmem:[%s2] sm:$0xf]
      %v272 = vld [vmem:[%s2 + $0x4] sm:$0xf]
      %v273 = vld [vmem:[%s2 + $0x8] sm:$0xf]
      %v274 = vld [vmem:[%s2 + $0xc] sm:$0xf]
      %v275 = vld [vmem:[%s2 + $0x10] sm:$0xf]
      %v276 = vld [vmem:[%s2 + $0x14] sm:$0xf]
      %v277 = vld [vmem:[%s2 + $0x18] sm:$0xf]
      %v278 = vld [vmem:[%s2 + $0x1c] sm:$0xf]
      %v279 = vld [vmem:[%s2 + $0x20] sm:$0xf]
      %v280 = vld [vmem:[%s2 + $0x24] sm:$0xf]
      %v281 = vld [vmem:[%s3] sm:$0x1]
      %v282 = vlaneseq
      %v283 = vshrl.u32 %v282, 7
      %v284 = vsub.s32 0, %v283
      %v285 = vrot.slane %v281, %v284
      %v296 = vunpack.c.l.b16 %v271
      %v297 = vunpack.c.l.b16 %v272
      %v298 = vunpack.c.l.b16 %v273
      %v299 = vunpack.c.l.b16 %v274
      %v300 = vunpack.c.l.b16 %v275
      %v301 = vunpack.c.l.b16 %v276
      %v302 = vunpack.c.l.b16 %v277
      %v303 = vunpack.c.l.b16 %v278
      %v304 = vunpack.c.l.b16 %v279
      %v305 = vunpack.c.l.b16 %v280
      %v306 = vpack.c.b16 %v297, %v296
      %v307 = vpack.c.b16 %v299, %v298
      %v308 = vpack.c.b16 %v301, %v300
      %v309 = vpack.c.b16 %v303, %v302
      %v310 = vpack.c.b16 %v305, %v304
      %vm316 = vcmask 654336
      %v318 = vsel %vm316, %v270, 0
      %320 = vmatprep.subr.bf16.mxu0 0
      %321 = vmatpush1.bf16.msra.mxu0 %v306
      %322 = vmatprep.subr.bf16.mxu0 0
      %323 = vmatpush1.bf16.msra.mxu0 %v307
      %324 = vmatprep.subr.bf16.mxu0 0
      %325 = vmatpush1.bf16.msra.mxu0 %v308
      %326 = vmatprep.subr.bf16.mxu0 0
      %327 = vmatpush1.bf16.msra.mxu0 %v309
      %328 = vmatprep.subr.bf16.mxu0 0
      %329 = vmatpush1.bf16.msra.mxu0 %v310
      %330 = vmatprep.subr.bf16.mxu0 0
      %331 = vmatpush1.bf16.msra.mxu0 0
      %332 = vmatprep.subr.bf16.mxu0 0
      %333 = vmatpush1.bf16.msra.mxu0 0
      %334 = vmatprep.subr.bf16.mxu0 0
      %335 = vmatpush1.bf16.msra.mxu0 0
      %336 = vmatprep.subr.bf16.mxu0 0
      %337 = vmatpush1.bf16.msra.mxu0 0
      %338 = vmatprep.subr.bf16.mxu0 0
      %339 = vmatpush1.bf16.msra.mxu0 0
      %340 = vmatprep.subr.bf16.mxu0 0
      %341 = vmatpush1.bf16.msra.mxu0 0
      %342 = vmatprep.subr.bf16.mxu0 0
      %343 = vmatpush1.bf16.msra.mxu0 0
      %344 = vmatprep.subr.bf16.mxu0 0
      %345 = vmatpush1.bf16.msra.mxu0 0
      %346 = vmatprep.subr.bf16.mxu0 0
      %347 = vmatpush1.bf16.msra.mxu0 0
      %348 = vmatprep.subr.bf16.mxu0 0
      %349 = vmatpush1.bf16.msra.mxu0 0
      %350 = vmatprep.subr.bf16.mxu0 0
      %351 = vmatpush1.bf16.msra.mxu0 0
      %352 = vmatprep.mubr.bf16.mxu0 0
      %353 = vmatmul.mubr.bf16.gmra.mrb[0].mxu0 %v318
      %v354 = vpop.f32.mrb[0].mxu0
      %v355 = vadd.f32 %v285, %v354
      %v356 = vpop.f32.mrb[0].mxu0
      %v357 = vpop.f32.mrb[0].mxu0
      %v358 = vpop.f32.mrb[0].mxu0
      %359 = vdwg.mxu0
      %v360 = vmul.f32 %v355, 0.5
      %v361 = vmul.f32 %v360, 1.442695
      %v362 = vpow.pop %v361
      %363 = vrot.lane.b32.xlu0 %v253, 112
      %v364 = vpop.permute.xlu0 %363
      %v366 = vmul.f32 %v362, %v364
      %368 = vrot.lane.b32.xlu0 %v366, 112
      %v369 = vpop.permute.xlu0 %368
      %v371 = vadd.f32 %v355, %v369
      %372 = vrot.lane.b32.xlu0 %v254, 16
      %v373 = vpop.permute.xlu0 %372
      %v375 = vsel %vm266, %v371, %v373
      %v376 = vpack.c.bf16 %v375, %v375
      %v377 = vld [vmem:[%s2 + $0x28] sm:$0xf]
      %v378 = vld [vmem:[%s2 + $0x2c] sm:$0xf]
      %v379 = vld [vmem:[%s2 + $0x30] sm:$0xf]
      %v380 = vld [vmem:[%s2 + $0x34] sm:$0xf]
      %v381 = vld [vmem:[%s2 + $0x38] sm:$0xf]
      %v382 = vld [vmem:[%s2 + $0x3c] sm:$0xf]
      %v383 = vld [vmem:[%s3 + $0x1] sm:$0x1]
      %v384 = vlaneseq
      %v385 = vshrl.u32 %v384, 7
      %v386 = vsub.s32 0, %v385
      %v387 = vrot.slane %v383, %v386
      %v394 = vunpack.c.l.b16 %v377
      %v395 = vunpack.c.l.b16 %v378
      %v396 = vunpack.c.l.b16 %v379
      %v397 = vunpack.c.l.b16 %v380
      %v398 = vunpack.c.l.b16 %v381
      %v399 = vunpack.c.l.b16 %v382
      %v400 = vpack.c.b16 %v395, %v394
      %v401 = vpack.c.b16 %v397, %v396
      %v402 = vpack.c.b16 %v399, %v398
      %v407 = vsel %vm268, %v376, 0
      %409 = vmatprep.subr.bf16.mxu0 0
      %410 = vmatpush1.bf16.msra.mxu0 %v400
      %411 = vmatprep.subr.bf16.mxu0 0
      %412 = vmatpush1.bf16.msra.mxu0 %v401
      %413 = vmatprep.subr.bf16.mxu0 0
      %414 = vmatpush1.bf16.msra.mxu0 %v402
      %415 = vmatprep.subr.bf16.mxu0 0
      %416 = vmatpush1.bf16.msra.mxu0 0
      %417 = vmatprep.subr.bf16.mxu0 0
      %418 = vmatpush1.bf16.msra.mxu0 0
      %419 = vmatprep.subr.bf16.mxu0 0
      %420 = vmatpush1.bf16.msra.mxu0 0
      %421 = vmatprep.subr.bf16.mxu0 0
      %422 = vmatpush1.bf16.msra.mxu0 0
      %423 = vmatprep.subr.bf16.mxu0 0
      %424 = vmatpush1.bf16.msra.mxu0 0
      %425 = vmatprep.subr.bf16.mxu0 0
      %426 = vmatpush1.bf16.msra.mxu0 0
      %427 = vmatprep.subr.bf16.mxu0 0
      %428 = vmatpush1.bf16.msra.mxu0 0
      %429 = vmatprep.subr.bf16.mxu0 0
      %430 = vmatpush1.bf16.msra.mxu0 0
      %431 = vmatprep.subr.bf16.mxu0 0
      %432 = vmatpush1.bf16.msra.mxu0 0
      %433 = vmatprep.subr.bf16.mxu0 0
      %434 = vmatpush1.bf16.msra.mxu0 0
      %435 = vmatprep.subr.bf16.mxu0 0
      %436 = vmatpush1.bf16.msra.mxu0 0
      %437 = vmatprep.subr.bf16.mxu0 0
      %438 = vmatpush1.bf16.msra.mxu0 0
      %439 = vmatprep.subr.bf16.mxu0 0
      %440 = vmatpush1.bf16.msra.mxu0 0
      %441 = vmatprep.mubr.bf16.mxu0 0
      %442 = vmatmul.mubr.bf16.gmra.mrb[0].mxu0 %v407
      %v443 = vpop.f32.mrb[0].mxu0
      %v444 = vadd.f32 %v387, %v443
      %v445 = vpop.f32.mrb[0].mxu0
      %v446 = vpop.f32.mrb[0].mxu0
      %v447 = vpop.f32.mrb[0].mxu0
      %448 = vdwg.mxu0
      %v449 = vadd.f32 %v444, 1.837877
      %v450 = vsub.f32 %v253, %v444
      %v451 = vmul.f32 %v450, %v450
      %v452 = vsub.f32 0.0, %v444
      %v453 = vmul.f32 %v452, 1.442695
      %v454 = vpow.pop %v453
      %456 = vrot.lane.b32.xlu0 %v454, 96
      %v457 = vpop.permute.xlu0 %456
      %v459 = vmul.f32 %v451, %v457
      %461 = vrot.lane.b32.xlu0 %v459, 32
      %v462 = vpop.permute.xlu0 %461
      %v464 = vadd.f32 %v449, %v462
      %v465 = vmul.f32 %v464, -0.5
      %467 = vrot.lane.b32.xlu0 %v465, 96
      %v468 = vpop.permute.xlu0 %467
      %vm470 = vcmask 261120
      %v471 = vsel %vm470, %v468, 0.0
      %472 = vadd.xlane.f32.xlu0 %v471
      %v473 = vpop.xlane.xlu0 %472
      %475 = vrot.lane.b32.xlu0 %v355, 32
      %v476 = vpop.permute.xlu0 %475
      %v478 = vsub.f32 %v355, %v476
      %v479 = vmul.f32 %v355, 1.442695
      %v480 = vpow.pop %v479
      %481 = vrot.lane.b32.xlu0 %v355, 96
      %v482 = vpop.permute.xlu0 %481
      %v484 = vsub.f32 %v355, %v482
      %v485 = vmul.f32 %v484, %v484
      %487 = vrot.lane.b32.xlu0 %v485, 16
      %v488 = vpop.permute.xlu0 %487
      %v490 = vadd.f32 %v480, %v488
      %v491 = vsub.f32 0.0, %v355
      %v492 = vmul.f32 %v491, 1.442695
      %v493 = vpow.pop %v492
      %495 = vrot.lane.b32.xlu0 %v493, 96
      %v496 = vpop.permute.xlu0 %495
      %v498 = vmul.f32 %v490, %v496
      %500 = vrot.lane.b32.xlu0 %v498, 32
      %v501 = vpop.permute.xlu0 %500
      %v503 = vadd.f32 %v478, %v501
      %v504 = vsub.f32 %v503, 1.0
      %v505 = vmul.f32 %v504, 0.5
      %507 = vrot.lane.b32.xlu0 %v505, 80
      %v508 = vpop.permute.xlu0 %507
      %v510 = vsel %vm266, %v508, 0.0
      %511 = vadd.xlane.f32.xlu0 %v510
      %v512 = vpop.xlane.xlu0 %511
      %514 = vrot.lane.b32.xlu0 %v444, 16
      %v515 = vpop.permute.xlu0 %514
      %v517 = vsel %vm266, %v371, %v515
      %v518 = vsel %vm268, %v517, %v515
      %v519 = vsel %vm316, %v518, %v473
      %vm520 = vcmask 662528
      %v521 = vsel %vm520, %v519, %v512
      %vm522 = vcmask 670720
      %v523 = vsel %vm522, %v521, 0.0
      %524 = vst [vmem:[%s245] sm:$0xff] %v523
      %526 = vrot.lane.b32.xlu0 %v371, 32
      %v527 = vpop.permute.xlu0 %526
      %v529 = vsel %vm470, %v253, %v527
      %v530 = vsel %vm268, %v529, 0.0
      %531 = vst [vmem:[#allocation2] sm:$0xff] %v530
      %p532 = scmp.lt.s32.totalorder %s19, 1
      %s533 = scalar_select %p532, %s19, 1
      %p534 = scmp.lt.s32.totalorder %s20, 15
      %s535 = scalar_select %p534, %s20, 15
      %s536 = smul.addr %s533, 16
      %s537 = sadd.s32 %s535, %s536
      %s538 = smul.addr %s537, 8
      %s539 = scalar_lea.vmem %s4, %s538
      // Predicated region
      $region41: #{model_sequence.1} parent=35 // pred_check
        %p540 = pneg %p143
      $region42: #{model_sequence.1} parent=35 // pred_check_branch
        %542 = sbr.rel (%p540) target = $region44
      $region43: #{model_sequence.1} parent=35 // pred_region
        _
      $region44: #{model_sequence.1} parent=35 // pred_fallthru
        _
    $region36: #{model_sequence.1} parent=5 // pred_fallthru
      _
    %p543 = scmp.le.s32.totalorder 2, %s10
    // Predicated region
    $region45: #{model_sequence.1} parent=5 // pred_check
      %p544 = pneg %p543
    $region46: #{model_sequence.1} parent=5 // pred_check_branch
      %546 = sbr.rel (%p544) target = $region48
    $region47: #{model_sequence.1} parent=5 // pred_region
      %s547 = ssub.s32 %s10, 2
      // Predicated region
      $region49: #{model_sequence.1} parent=47 // pred_check
        %p548 = pneg %p149
      $region50: #{model_sequence.1} parent=47 // pred_check_branch
        %550 = sbr.rel (%p548) target = $region52
      $region51: #{model_sequence.1} parent=47 // pred_region
        %p551 = scmp.lt.s32.totalorder %s21, 1
        %s552 = scalar_select %p551, %s21, 1
        %p553 = scmp.lt.s32.totalorder %s22, 15
        %s554 = scalar_select %p553, %s22, 15
        %s555 = smul.addr %s552, 16
        %s556 = sadd.s32 %s554, %s555
        %s557 = smul.addr %s556, 8
        %s558 = scalar_lea.vmem %s4, %s557
      $region52: #{model_sequence.1} parent=47 // pred_fallthru
        _
    $region48: #{model_sequence.1} parent=5 // pred_fallthru
      _
  $region6: #{model_sequence.1} parent=0 // loop_footer
    %s14 = sadd.s32 1, %s10
  $region7: #{model_sequence.1} parent=0 // loop_footer_branch
    %9 = sbr.rel target = $region3
  $region8: #{model_sequence.1} parent=0 // loop_exit
    _

</llo_original>
